<compile_context>
chip_gen: v7x
topology: tpu7x:2x2x1
jax: 0.10.0
libtpu: 0.0.40
codegen_flags: <defaults>
</compile_context>

<pallas_src>
import jax
import jax.numpy as jnp
from jax.experimental import pallas as pl
from jax.experimental.pallas import tpu as pltpu


_LANES = 128
_TARGET_TILE_BYTES = 2 * 1024 * 1024   # ~2 MiB per input block (~85% HBM roofline)
_MIN_GRID_STEPS = 8                    # keep several blocks so v7x's 2 TCs share work


def _round_up(x, m):
    return (x + m - 1) // m * m


# ----------------------------- mixup kernel --------------------------------

def _mixup_kernel(lam_ref, x1_ref, x2_ref, out_ref):
    """out = x2 + lam * (x1 - x2)  (== lam*x1 + (1-lam)*x2, one fewer vmul)."""
    lam = lam_ref[0]                                   # f32 scalar from SMEM
    x1 = x1_ref[...]
    x2 = x2_ref[...]
    out_ref[...] = (x2 + lam * (x1 - x2)).astype(out_ref.dtype)


def pallas_mixup(x1, x2, lam_scalar):
    """Elementwise mixup of two same-shaped arrays (any rank).

    Flattened to a lane-dense (rows, 128) slab; row tiles sized to ~2 MiB.
    Row raggedness is handled with a cdiv grid; only a <=127-element lane-tail
    pad ever copies data (uncommon for video tensors).
    """
    orig_shape = x1.shape
    dtype = x1.dtype
    n = x1.size

    x1f = x1.reshape(-1)
    x2f = x2.reshape(-1)
    n_pad = _round_up(n, _LANES)
    if n_pad != n:
        # TODO(synk): lane-tail pad round-trips the tensor through HBM once;
        # only hit when numel % 128 != 0.
        x1f = jnp.pad(x1f, (0, n_pad - n))
        x2f = jnp.pad(x2f, (0, n_pad - n))

    rows = n_pad // _LANES
    x1_2d = x1f.reshape(rows, _LANES)
    x2_2d = x2f.reshape(rows, _LANES)

    bytes_per_row = _LANES * jnp.dtype(dtype).itemsize
    max_tile_rows = max(8, _TARGET_TILE_BYTES // bytes_per_row)    # ~4096 @ f32
    if rows <= 8:
        tile_rows = rows                                           # full-dim block
    else:
        tile_rows = max(8, min(max_tile_rows, pl.cdiv(rows, _MIN_GRID_STEPS)))
        tile_rows = _round_up(tile_rows, 8)

    grid = (pl.cdiv(rows, tile_rows),)
    lam_arr = jnp.asarray(lam_scalar, jnp.float32).reshape((1,))

    out_2d = pl.pallas_call(
        _mixup_kernel,
        out_shape=jax.ShapeDtypeStruct((rows, _LANES), dtype),
        grid=grid,
        in_specs=[
            pl.BlockSpec(memory_space=pltpu.MemorySpace.SMEM),      # lam (1,)
            pl.BlockSpec((tile_rows, _LANES), lambda i: (i, 0)),    # x1 tile
            pl.BlockSpec((tile_rows, _LANES), lambda i: (i, 0)),    # x2 tile
        ],
        out_specs=pl.BlockSpec((tile_rows, _LANES), lambda i: (i, 0)),
        compiler_params=pltpu.CompilerParams(
            dimension_semantics=("parallel",)),
    )(lam_arr, x1_2d, x2_2d)

    out = out_2d.reshape(-1)
    if n_pad != n:
        out = out[:n]
    return out.reshape(orig_shape)


# ----------------------- batched flow consistency --------------------------

def _flow_consistency_kernel(f1_ref, f2_ref, out_ref):
    """Batch-averaged motion consistency.

    Inputs are channel-major (2*B, H*W): rows [0, B) hold channel 0 of every
    sample, rows [B, 2B) hold channel 1.  Per sample the PyTorch reference
    computes the mean of the (2, 2) broadcast dot[j] / (|f1_i||f2_i| + eps),
    which factorises exactly to 0.25 * (sum_j dot[j]) * (sum_i 1/denom[i]);
    the kernel emits the mean of that over the batch as a (1, 1) scalar.
    """
    f1 = f1_ref[...].astype(jnp.float32)               # (2B, HW)
    f2 = f2_ref[...].astype(jnp.float32)
    b = f1_ref.shape[0] // 2

    dot = jnp.sum(f1 * f2, axis=1, keepdims=True)      # (2B, 1)
    sq1 = jnp.sum(f1 * f1, axis=1, keepdims=True)      # (2B, 1)
    sq2 = jnp.sum(f2 * f2, axis=1, keepdims=True)      # (2B, 1)
    inv_denom = 1.0 / (jnp.sqrt(sq1) * jnp.sqrt(sq2) + 1e-08)

    dot_sum = dot[0:b] + dot[b:2 * b]                  # (B, 1): sum over 2 channels
    inv_sum = inv_denom[0:b] + inv_denom[b:2 * b]      # (B, 1)
    cons = dot_sum * inv_sum * 0.25                    # (B, 1) per-sample consistency
    out_ref[...] = jnp.sum(cons, axis=0, keepdims=True) * (1.0 / b)


def pallas_avg_motion_consistency(flows1_t0, flows2_t0):
    """flows*_t0: (B, 2, H, W) first-timestep flows.

    Returns the batch-average consistency scalar with a single pallas_call
    (replaces B per-sample launches + host-side epilogues).
    """
    B, _, H, W = flows1_t0.shape
    hw = H * W
    # Channel-major layout so the per-sample channel sum is two contiguous
    # static row slices inside the kernel (no strided access / reshape).
    f1 = jnp.transpose(flows1_t0, (1, 0, 2, 3)).reshape(2 * B, hw)
    f2 = jnp.transpose(flows2_t0, (1, 0, 2, 3)).reshape(2 * B, hw)
    # TODO(synk): the whole (2B, H*W) flow slab is taken as one VMEM block;
    # tile along H*W if B * H * W grows to many MiB (v7x has 64 MiB VMEM).
    out = pl.pallas_call(
        _flow_consistency_kernel,
        out_shape=jax.ShapeDtypeStruct((1, 1), jnp.float32),
    )(f1, f2)
    return out[0, 0]


# ------------------------------- module ------------------------------------

class MotionAwareMixupJAX:
    def __init__(self, args):
        self.args = args
        self.flow_alpha = args.flow_alpha

    def forward(self, x1, x2, lam, flows1=None, flows2=None):
        """x1, x2: (B, C, T, H, W); lam: (1,) f32.

        flows1/flows2: precomputed per-sample flows (B, 2, T-1, H, W)
        (stand-in for cv2 Farneback flow, which is untranslatable).
        """
        if not self.args.use_motion:
            return pallas_mixup(x1, x2, lam), lam

        # reference uses flow[:, 0]: first flow timestep -> (B, 2, H, W)
        avg_consistency = pallas_avg_motion_consistency(
            flows1[:, :, 0], flows2[:, :, 0])

        adjusted_lam = lam + self.flow_alpha * (0.5 - lam) * avg_consistency
        adjusted_lam = jnp.clip(adjusted_lam, 0.0, 1.0)

        mixed = pallas_mixup(x1, x2, adjusted_lam)
        return mixed, adjusted_lam


# --------------------------------- main -------------------------------------

if __name__ == "__main__":
    class Args:
        pass

    args = Args()
    args.flow_alpha = 0.5
    args.use_motion = True

    B, C, T, H, W = 2, 3, 4, 16, 16
    key = jax.random.PRNGKey(0)
    k1, k2, k3, k4 = jax.random.split(key, 4)
    x1 = jax.random.normal(k1, (B, C, T, H, W), jnp.float32)
    x2 = jax.random.normal(k2, (B, C, T, H, W), jnp.float32)
    flows1 = jax.random.normal(k3, (B, 2, T - 1, H, W), jnp.float32)
    flows2 = jax.random.normal(k4, (B, 2, T - 1, H, W), jnp.float32)
    lam = jnp.array([0.7], jnp.float32)

    module = MotionAwareMixupJAX(args)
    mixed, adj_lam = module.forward(x1, x2, lam, flows1, flows2)
    mixed = jax.block_until_ready(mixed)
    adj_lam = jax.block_until_ready(adj_lam)

    # Pure-JAX reference of the whole forward pass (reproduces the PyTorch
    # reference's (2,)/(2,1) broadcast in compute_motion_consistency).
    def ref_consistency(fl1, fl2):
        a = fl1.reshape(2, -1)
        b = fl2.reshape(2, -1)
        n1 = jnp.linalg.norm(a, axis=1, keepdims=True)
        n2 = jnp.linalg.norm(b, axis=1, keepdims=True)
        cos = jnp.sum(a * b, axis=1) / (n1 * n2 + 1e-08)
        return jnp.mean(cos)

    cons = [ref_consistency(flows1[b, :, 0], flows2[b, :, 0]) for b in range(B)]
    avg_c = sum(cons) / len(cons)
    ref_lam = jnp.clip(lam + args.flow_alpha * (0.5 - lam) * avg_c, 0.0, 1.0)
    ref_mixed = ref_lam * x1 + (1.0 - ref_lam) * x2

    assert mixed.shape == (B, C, T, H, W)
    assert adj_lam.shape == (1,)
    assert jnp.allclose(adj_lam, ref_lam, atol=1e-5, rtol=1e-5)
    assert jnp.allclose(mixed, ref_mixed, atol=1e-5, rtol=1e-5)

    # no-motion path sanity check
    args.use_motion = False
    mixed_plain, lam_out = module.forward(x1, x2, lam)
    mixed_plain = jax.block_until_ready(mixed_plain)
    assert jnp.allclose(mixed_plain, lam * x1 + (1.0 - lam) * x2,
                        atol=1e-5, rtol=1e-5)
    assert jnp.allclose(lam_out, lam)

    print("KERNEL_OK")
</pallas_src>

<mosaic_0001>
module attributes {stable_mosaic.version = 11 : i64} {
  func.func @_flow_consistency_kernel(%arg0: memref<4x256xf32, #tpu.memory_space<vmem>>, %arg1: memref<4x256xf32, #tpu.memory_space<vmem>>, %arg2: memref<1x1xf32, #tpu.memory_space<vmem>>) attributes {dimension_semantics = [], scalar_prefetch = 0 : i64, scratch_operands = 0 : i64, tpu.core_type = #tpu.core_type<tc>} {
    %c0 = arith.constant 0 : index
    %c0_0 = arith.constant 0 : index
    %0 = vector.load %arg0[%c0, %c0_0] : memref<4x256xf32, #tpu.memory_space<vmem>>, vector<4x256xf32>
    %c0_1 = arith.constant 0 : index
    %c0_2 = arith.constant 0 : index
    %1 = vector.load %arg1[%c0_1, %c0_2] : memref<4x256xf32, #tpu.memory_space<vmem>>, vector<4x256xf32>
    %2 = arith.mulf %0, %1 : vector<4x256xf32>
    %cst = arith.constant dense<0.000000e+00> : vector<4xf32>
    %3 = vector.multi_reduction <add>, %2, %cst [1] : vector<4x256xf32> to vector<4xf32>
    %4 = vector.shape_cast %3 : vector<4xf32> to vector<4x1xf32>
    %5 = arith.mulf %0, %0 : vector<4x256xf32>
    %cst_3 = arith.constant dense<0.000000e+00> : vector<4xf32>
    %6 = vector.multi_reduction <add>, %5, %cst_3 [1] : vector<4x256xf32> to vector<4xf32>
    %7 = vector.shape_cast %6 : vector<4xf32> to vector<4x1xf32>
    %8 = arith.mulf %1, %1 : vector<4x256xf32>
    %cst_4 = arith.constant dense<0.000000e+00> : vector<4xf32>
    %9 = vector.multi_reduction <add>, %8, %cst_4 [1] : vector<4x256xf32> to vector<4xf32>
    %10 = vector.shape_cast %9 : vector<4xf32> to vector<4x1xf32>
    %11 = math.sqrt %7 : vector<4x1xf32>
    %12 = math.sqrt %10 : vector<4x1xf32>
    %13 = arith.mulf %11, %12 : vector<4x1xf32>
    %cst_5 = arith.constant 9.99999993E-9 : f32
    %14 = vector.broadcast %cst_5 : f32 to vector<4x1xf32>
    %15 = arith.addf %13, %14 : vector<4x1xf32>
    %cst_6 = arith.constant 1.000000e+00 : f32
    %16 = vector.broadcast %cst_6 : f32 to vector<4x1xf32>
    %17 = arith.divf %16, %15 : vector<4x1xf32>
    %18 = vector.extract_strided_slice %4 {offsets = [0, 0], sizes = [2, 1], strides = [1, 1]} : vector<4x1xf32> to vector<2x1xf32>
    %19 = vector.extract_strided_slice %4 {offsets = [2, 0], sizes = [2, 1], strides = [1, 1]} : vector<4x1xf32> to vector<2x1xf32>
    %20 = arith.addf %18, %19 : vector<2x1xf32>
    %21 = vector.extract_strided_slice %17 {offsets = [0, 0], sizes = [2, 1], strides = [1, 1]} : vector<4x1xf32> to vector<2x1xf32>
    %22 = vector.extract_strided_slice %17 {offsets = [2, 0], sizes = [2, 1], strides = [1, 1]} : vector<4x1xf32> to vector<2x1xf32>
    %23 = arith.addf %21, %22 : vector<2x1xf32>
    %24 = arith.mulf %20, %23 : vector<2x1xf32>
    %cst_7 = arith.constant 2.500000e-01 : f32
    %25 = vector.broadcast %cst_7 : f32 to vector<2x1xf32>
    %26 = arith.mulf %24, %25 : vector<2x1xf32>
    %cst_8 = arith.constant dense<0.000000e+00> : vector<1xf32>
    %27 = vector.multi_reduction <add>, %26, %cst_8 [0] : vector<2x1xf32> to vector<1xf32>
    %28 = vector.shape_cast %27 : vector<1xf32> to vector<1x1xf32>
    %cst_9 = arith.constant 5.000000e-01 : f32
    %29 = vector.broadcast %cst_9 : f32 to vector<1x1xf32>
    %30 = arith.mulf %28, %29 : vector<1x1xf32>
    %c0_10 = arith.constant 0 : index
    %c0_11 = arith.constant 0 : index
    %31 = vector.load %arg2[%c0_10, %c0_11] : memref<1x1xf32, #tpu.memory_space<vmem>>, vector<1x1xf32>
    tpu.vector_store %arg2[%c0_10, %c0_11], %30 {strides = array<i32>} : memref<1x1xf32, #tpu.memory_space<vmem>>, vector<1x1xf32>,
    return
  }
}

</mosaic_0001>

<llo_original>
// kernel: tpu_custom_call.1
$region0: #{tpu_custom_call.1}
  #allocation0 [shape = 'u32[]', space=smem, size = 0x4, offset = 0x4, fixed_abs, tag = 'smem constant byte address 0x4 - core index']
  #allocation1 [shape = 'u32[144,128]{1,0:T(1,128)}', space=vmem, size = 0x12000, scoped, tag = 'internal scratch']
  %s0 = inlined_call_operand.hbm [shape: f32[4,256], index: 0, kind: input, shape index: {}]
  %s1 = inlined_call_operand.hbm [shape: f32[4,256], index: 1, kind: input, shape index: {}]
  %s2 = inlined_call_operand.hbm [shape: f32[1,1], index: 2, kind: output, shape index: {}]
  %s3 = sld [smem:[#allocation0]]
  $region26: #{tpu_custom_call.1} parent=0
    _
  %s5 = ssub.s32 1, %s3
  %s6 = scalar_select 0, %s5, %s3
  $region1: #{tpu_custom_call.1} parent=0
    #allocation2 [shape = 'u8[4096]{0}', space=vmem, size = 0x1000, scoped, tag = 'input window, operand 0, single buffered']
    #allocation3 [shape = 's32[1]{0}', space=sflag, size = 0x4, scoped, tag = 'scoped memory for tpu_custom_call.1']
    #allocation4 [shape = 's32[1]{0}', space=sflag, size = 0x4, scoped, tag = 'scoped memory for tpu_custom_call.1']
    #allocation5 [shape = 'u8[4096]{0}', space=vmem, size = 0x1000, scoped, tag = 'input window, operand 1, single buffered']
    #allocation6 [shape = 's32[1]{0}', space=sflag, size = 0x4, scoped, tag = 'scoped memory for tpu_custom_call.1']
    #allocation7 [shape = 'u8[512]{0}', space=vmem, size = 0x400, scoped, tag = 'output window, operand 0, single buffered']
    %7 = vsyncpa [#allocation3], 0
    %8 = vsyncpa [#allocation6], 0
    %9 = vsyncpa [#allocation4], 0
    // Predicated region
    $region2: #{tpu_custom_call.1} parent=1 // pred_check
      _
    $region3: #{tpu_custom_call.1} parent=1 // pred_check_branch
      %11 = sbr.rel (0) target = $region5
    $region4: #{tpu_custom_call.1} parent=1 // pred_region
      %s13 = ssub.s32 128, 128
      %14 = vsyncadd [#allocation3], %s13
      %s16 = sshll.u32 [#allocation2], 4
      %s17 = int_to_ptr.vmem [resolvable:$true] %s16
      %19 = dma.hbm_to_vmem [thread:$0]  %s0, 128, %s17, [#allocation3]
    $region5: #{tpu_custom_call.1} parent=1 // pred_fallthru
      _
    // Predicated region
    $region6: #{tpu_custom_call.1} parent=1 // pred_check
      _
    $region7: #{tpu_custom_call.1} parent=1 // pred_check_branch
      %21 = sbr.rel (0) target = $region9
    $region8: #{tpu_custom_call.1} parent=1 // pred_region
      %s23 = ssub.s32 128, 128
      %24 = vsyncadd [#allocation6], %s23
      %s26 = sshll.u32 [#allocation5], 4
      %s27 = int_to_ptr.vmem [resolvable:$true] %s26
      %29 = dma.hbm_to_vmem [thread:$0]  %s1, 128, %s27, [#allocation6]
    $region9: #{tpu_custom_call.1} parent=1 // pred_fallthru
      _
    // Predicated region
    $region10: #{tpu_custom_call.1} parent=1 // pred_check
      _
    $region11: #{tpu_custom_call.1} parent=1 // pred_check_branch
      %31 = sbr.rel (0) target = $region13
    $region12: #{tpu_custom_call.1} parent=1 // pred_region
      %32 = dma.done [#allocation3], 128
    $region13: #{tpu_custom_call.1} parent=1 // pred_fallthru
      _
    // Predicated region
    $region14: #{tpu_custom_call.1} parent=1 // pred_check
      _
    $region15: #{tpu_custom_call.1} parent=1 // pred_check_branch
      %34 = sbr.rel (0) target = $region17
    $region16: #{tpu_custom_call.1} parent=1 // pred_region
      %35 = dma.done [#allocation6], 128
    $region17: #{tpu_custom_call.1} parent=1 // pred_fallthru
      _
    %v36 = vld [vmem:[#allocation2] sm:$0xff]
    %v37 = vld [vmem:[#allocation5] sm:$0xff]
    %v38 = vmul.f32 %v36, %v37
    %v40 = vcombine.high %v38, %v38
    %vm42 = vcmask 1043456
    %v43 = vsel %vm42, %v38, 0.0
    %v44 = vsel %vm42, %v40, 0.0
    %v45 = vadd.f32 %v43, %v44
    %46 = vadd.xlane.f32.xlu0 %v45
    %v47 = vpop.xlane.xlu0 %46
    %v48 = vmul.f32 %v36, %v36
    %v50 = vcombine.high %v48, %v48
    %v52 = vsel %vm42, %v48, 0.0
    %v53 = vsel %vm42, %v50, 0.0
    %v54 = vadd.f32 %v52, %v53
    %55 = vadd.xlane.f32.xlu0 %v54
    %v56 = vpop.xlane.xlu0 %55
    %v57 = vmul.f32 %v37, %v37
    %v59 = vcombine.high %v57, %v57
    %v61 = vsel %vm42, %v57, 0.0
    %v62 = vsel %vm42, %v59, 0.0
    %v63 = vadd.f32 %v61, %v62
    %64 = vadd.xlane.f32.xlu0 %v63
    %v65 = vpop.xlane.xlu0 %64
    %v66 = vrsqrt.pop %v56
    %v67 = vmul.f32 %v56, %v66
    %vm68 = vcmp.eq.f32.partialorder %v56, inf
    %v69 = vsel %vm68, %v56, %v67
    %vm70 = vcmp.eq.f32.partialorder %v56, 0.0
    %v71 = vand.u32 %v56, 2147483648
    %v72 = vsel %vm70, %v71, %v69
    %v73 = vrsqrt.pop %v65
    %v74 = vmul.f32 %v65, %v73
    %vm75 = vcmp.eq.f32.partialorder %v65, inf
    %v76 = vsel %vm75, %v65, %v74
    %vm77 = vcmp.eq.f32.partialorder %v65, 0.0
    %v78 = vand.u32 %v65, 2147483648
    %v79 = vsel %vm77, %v78, %v76
    %v80 = vmul.f32 %v72, %v79
    %v81 = vadd.f32 %v80, 1e-08
    %v82 = vrcp.pop %v81
    %v83 = vmul.f32 1.0, %v82
    %v85 = vrot.slane %v47, 2
    %v87 = vadd.f32 %v47, %v85
    %v89 = vrot.slane %v83, 2
    %v91 = vadd.f32 %v83, %v89
    %v92 = vmul.f32 %v87, %v91
    %v93 = vmul.f32 %v92, 0.25
    %vm94 = vcmask 1024
    %v95 = vsel %vm94, %v93, 0.0
    %v96 = vrot.slane %v95, 4
    %v97 = vadd.f32 %v95, %v96
    %v98 = vrot.slane %v97, 2
    %v99 = vadd.f32 %v97, %v98
    %v100 = vrot.slane %v99, 1
    %v101 = vadd.f32 %v99, %v100
    %v102 = vmul.f32 %v101, 0.5
    %vm103 = vcmask 0
    %104 = vst.msk [vmem:[#allocation7] sm:$0x1] %vm103, %v102
    // Predicated region
    $region18: #{tpu_custom_call.1} parent=1 // pred_check
      _
    $region19: #{tpu_custom_call.1} parent=1 // pred_check_branch
      %106 = sbr.rel (0) target = $region21
    $region20: #{tpu_custom_call.1} parent=1 // pred_region
      %s108 = ssub.s32 16, 16
      %109 = vsyncadd [#allocation4], %s108
      %s111 = sshll.u32 [#allocation7], 4
      %s112 = int_to_ptr.vmem [resolvable:$true] %s111
      %114 = dma.vmem_to_hbm [thread:$0]  %s112, 16, %s2, [#allocation4]
    $region21: #{tpu_custom_call.1} parent=1 // pred_fallthru
      _
    // Predicated region
    $region22: #{tpu_custom_call.1} parent=1 // pred_check
      _
    $region23: #{tpu_custom_call.1} parent=1 // pred_check_branch
      %116 = sbr.rel (0) target = $region25
    $region24: #{tpu_custom_call.1} parent=1 // pred_region
      %117 = dma.done [#allocation4], 16
    $region25: #{tpu_custom_call.1} parent=1 // pred_fallthru
      _
    %118 = vsyncpa [#allocation3], 1
    %119 = vsyncpa [#allocation6], 1
    %120 = vsyncpa [#allocation4], 1

</llo_original>
